<compile_context>
chip_gen: v7x
topology: tpu7x:2x2x1
jax: 0.10.0
libtpu: 0.0.40
codegen_flags: <defaults>
</compile_context>

<pallas_src>
import functools

import jax
import jax.numpy as jnp
from jax import lax
from jax.experimental import pallas as pl
from jax.experimental.pallas import tpu as pltpu


def _round_up(n, m):
    return ((n + m - 1) // m) * m


def _prenorm_ffn_kernel(x_ref, g_ref, bta_ref, w1_ref, b1_ref, w2_ref, b2_ref,
                        o_ref, *, dim_real, eps):
    # x_ref: (tm, dp)        g_ref/bta_ref: (1, dp)
    # w1_ref: (dp, hp)       b1_ref: (1, hp)
    # w2_ref: (hp, dp)       b2_ref: (1, dp)
    # o_ref: (tm, dp)
    x = x_ref[...].astype(jnp.float32)          # LayerNorm math in f32
    tm, dp = x.shape

    # --- LayerNorm over the real (unpadded) feature dim --------------------
    lane = lax.broadcasted_iota(jnp.int32, (tm, dp), 1)
    mask = (lane < dim_real).astype(jnp.float32)
    inv_dim = jnp.float32(1.0 / dim_real)

    mean = jnp.sum(x, axis=-1, keepdims=True) * inv_dim      # padded lanes are zero
    centered = (x - mean) * mask
    var = jnp.sum(centered * centered, axis=-1, keepdims=True) * inv_dim
    rstd = lax.rsqrt(var + jnp.float32(eps))
    xn = centered * rstd * g_ref[...].astype(jnp.float32) + bta_ref[...].astype(jnp.float32)

    # Feed the MXU in the parameter dtype (no f32 up-cast of weights).
    xn = xn.astype(w1_ref.dtype)

    # --- FeedForward: Linear -> GELU(exact erf) -> Linear -------------------
    h = jnp.dot(xn, w1_ref[...], preferred_element_type=jnp.float32)
    h = h + b1_ref[...].astype(jnp.float32)
    h = 0.5 * h * (1.0 + lax.erf(h * jnp.float32(0.7071067811865476)))
    # Dropout(p=0.0) == identity.

    h = h.astype(w2_ref.dtype)
    y = jnp.dot(h, w2_ref[...], preferred_element_type=jnp.float32)
    y = y + b2_ref[...].astype(jnp.float32)
    # Dropout(p=0.0) == identity.

    o_ref[...] = y.astype(o_ref.dtype)


@functools.partial(jax.jit, static_argnames=("eps",))
def prenorm_feed_forward(x, gamma, beta, w1, b1, w2, b2, eps=1e-5):
    """PreNorm(dim, FeedForward(dim, hidden)) forward.

    x: (batch, seq, dim); gamma/beta: (dim,); w1: (dim, hidden); b1: (hidden,);
    w2: (hidden, dim); b2: (dim,).   Returns (batch, seq, dim).
    """
    batch, seq, dim = x.shape
    hidden = w1.shape[1]
    m = batch * seq

    # Lane-dense padded sizes (multiples of 128) and M tiling.
    dp = _round_up(dim, 128)
    hp = _round_up(hidden, 128)
    tile_m = 256 if m >= 256 else _round_up(m, 8)
    mp = _round_up(m, tile_m)

    elt = jnp.dtype(x.dtype).itemsize

    # Zero-pad everything once in the wrapper (cheap XLA ops, done once per call).
    x2d = jnp.pad(x.reshape(m, dim), ((0, mp - m), (0, dp - dim)))
    g2d = jnp.pad(gamma, (0, dp - dim)).reshape(1, dp)
    bt2d = jnp.pad(beta, (0, dp - dim)).reshape(1, dp)
    w1p = jnp.pad(w1, ((0, dp - dim), (0, hp - hidden)))
    b1p = jnp.pad(b1, (0, hp - hidden)).reshape(1, hp)
    w2p = jnp.pad(w2, ((0, hp - hidden), (0, dp - dim)))
    b2p = jnp.pad(b2, (0, dp - dim)).reshape(1, dp)

    kernel = functools.partial(_prenorm_ffn_kernel, dim_real=dim, eps=eps)

    cost = pl.CostEstimate(
        flops=4 * mp * dp * hp,                 # two matmuls
        transcendentals=mp * hp,                # erf in GELU
        bytes_accessed=(mp * dp * 2 + dp * hp + hp * dp + 2 * dp + hp) * elt,
    )

    out = pl.pallas_call(
        kernel,
        out_shape=jax.ShapeDtypeStruct((mp, dp), x.dtype),
        grid_spec=pltpu.PrefetchScalarGridSpec(
            num_scalar_prefetch=0,
            grid=(mp // tile_m,),
            in_specs=[
                pl.BlockSpec((tile_m, dp), lambda i: (i, 0)),   # x tile
                pl.BlockSpec((1, dp), lambda i: (0, 0)),        # layernorm gamma
                pl.BlockSpec((1, dp), lambda i: (0, 0)),        # layernorm beta
                pl.BlockSpec((dp, hp), lambda i: (0, 0)),       # w1 (resident)
                pl.BlockSpec((1, hp), lambda i: (0, 0)),        # b1
                pl.BlockSpec((hp, dp), lambda i: (0, 0)),       # w2 (resident)
                pl.BlockSpec((1, dp), lambda i: (0, 0)),        # b2
            ],
            out_specs=pl.BlockSpec((tile_m, dp), lambda i: (i, 0)),
        ),
        compiler_params=pltpu.CompilerParams(
            dimension_semantics=("parallel",),
            # Enough for resident weights + double-buffered tiles at tile_m=256,
            # while leaving headroom on v7x's 64 MiB VMEM.
            vmem_limit_bytes=48 * 1024 * 1024,
        ),
        cost_estimate=cost,
    )(x2d, g2d, bt2d, w1p, b1p, w2p, b2p)

    return out[:m, :dim].reshape(batch, seq, dim)


def _reference(x, gamma, beta, w1, b1, w2, b2, eps=1e-5):
    mean = x.mean(-1, keepdims=True)
    var = ((x - mean) ** 2).mean(-1, keepdims=True)
    xn = (x - mean) / jnp.sqrt(var + eps) * gamma + beta
    h = jnp.dot(xn, w1) + b1
    h = jax.nn.gelu(h, approximate=False)
    return jnp.dot(h, w2) + b2


if __name__ == "__main__":
    # Small shapes consistent with the module: tokens of dim=32, hidden_dim=64.
    batch, seq, dim, hidden = 2, 8, 32, 64

    key = jax.random.PRNGKey(0)
    kx, kg, kb, k1, k2, k3, k4 = jax.random.split(key, 7)

    x = jax.random.normal(kx, (batch, seq, dim), dtype=jnp.float32)

    # LayerNorm params (PyTorch init: gamma=1, beta=0; perturb slightly to exercise them).
    gamma = 1.0 + 0.1 * jax.random.normal(kg, (dim,), dtype=jnp.float32)
    beta = 0.1 * jax.random.normal(kb, (dim,), dtype=jnp.float32)

    # Linear params (PyTorch default: U(-1/sqrt(fan_in), 1/sqrt(fan_in))), stored as (in, out).
    bound1 = 1.0 / jnp.sqrt(dim)
    bound2 = 1.0 / jnp.sqrt(hidden)
    w1 = jax.random.uniform(k1, (dim, hidden), jnp.float32, -bound1, bound1)
    b1 = jax.random.uniform(k2, (hidden,), jnp.float32, -bound1, bound1)
    w2 = jax.random.uniform(k3, (hidden, dim), jnp.float32, -bound2, bound2)
    b2 = jax.random.uniform(k4, (dim,), jnp.float32, -bound2, bound2)

    out = prenorm_feed_forward(x, gamma, beta, w1, b1, w2, b2)
    out = jax.block_until_ready(out)

    ref = _reference(x, gamma, beta, w1, b1, w2, b2)
    assert out.shape == x.shape
    assert jnp.allclose(out, ref, atol=2e-5, rtol=2e-5), "mismatch vs JAX reference"

    print("KERNEL_OK")
</pallas_src>

<mosaic_0001>
module attributes {stable_mosaic.version = 11 : i64} {
  func.func @_prenorm_ffn_kernel(%arg0: i32, %arg1: memref<16x128xf32, #tpu.memory_space<vmem>>, %arg2: memref<1x128xf32, #tpu.memory_space<vmem>>, %arg3: memref<1x128xf32, #tpu.memory_space<vmem>>, %arg4: memref<128x128xf32, #tpu.memory_space<vmem>>, %arg5: memref<1x128xf32, #tpu.memory_space<vmem>>, %arg6: memref<128x128xf32, #tpu.memory_space<vmem>>, %arg7: memref<1x128xf32, #tpu.memory_space<vmem>>, %arg8: memref<16x128xf32, #tpu.memory_space<vmem>>) attributes {dimension_semantics = [#tpu.dimension_semantics<parallel>], iteration_bounds = array<i64: 1>, scalar_prefetch = 0 : i64, scratch_operands = 0 : i64, tpu.core_type = #tpu.core_type<tc>, window_params = [{transform_indices = @transform_0, window_bounds = array<i64: 16, 128>}, {pipeline_mode = #tpu.pipeline_mode<synchronous>, transform_indices = @transform_1, window_bounds = array<i64: 1, 128>}, {pipeline_mode = #tpu.pipeline_mode<synchronous>, transform_indices = @transform_2, window_bounds = array<i64: 1, 128>}, {pipeline_mode = #tpu.pipeline_mode<synchronous>, transform_indices = @transform_3, window_bounds = array<i64: 128, 128>}, {pipeline_mode = #tpu.pipeline_mode<synchronous>, transform_indices = @transform_4, window_bounds = array<i64: 1, 128>}, {pipeline_mode = #tpu.pipeline_mode<synchronous>, transform_indices = @transform_5, window_bounds = array<i64: 128, 128>}, {pipeline_mode = #tpu.pipeline_mode<synchronous>, transform_indices = @transform_6, window_bounds = array<i64: 1, 128>}, {transform_indices = @transform_7, window_bounds = array<i64: 16, 128>}]} {
    %c0 = arith.constant 0 : index
    %c0_0 = arith.constant 0 : index
    %0 = vector.load %arg1[%c0, %c0_0] : memref<16x128xf32, #tpu.memory_space<vmem>>, vector<16x128xf32>
    %1 = tpu.iota {dimensions = array<i32: 1>} : vector<16x128xi32>
    %c32_i32 = arith.constant 32 : i32
    %2 = vector.broadcast %c32_i32 : i32 to vector<16x128xi32>
    %3 = arith.cmpi slt, %1, %2 : vector<16x128xi32>
    %4 = arith.extui %3 : vector<16x128xi1> to vector<16x128xi32>
    %5 = arith.sitofp %4 : vector<16x128xi32> to vector<16x128xf32>
    %cst = arith.constant dense<0.000000e+00> : vector<16xf32>
    %6 = vector.multi_reduction <add>, %0, %cst [1] : vector<16x128xf32> to vector<16xf32>
    %7 = vector.shape_cast %6 : vector<16xf32> to vector<16x1xf32>
    %cst_1 = arith.constant 3.125000e-02 : f32
    %8 = vector.broadcast %cst_1 : f32 to vector<16x1xf32>
    %9 = arith.mulf %7, %8 : vector<16x1xf32>
    %10 = vector.broadcast %9 : vector<16x1xf32> to vector<16x128xf32>
    %11 = arith.subf %0, %10 : vector<16x128xf32>
    %12 = arith.mulf %11, %5 : vector<16x128xf32>
    %13 = arith.mulf %12, %12 : vector<16x128xf32>
    %cst_2 = arith.constant dense<0.000000e+00> : vector<16xf32>
    %14 = vector.multi_reduction <add>, %13, %cst_2 [1] : vector<16x128xf32> to vector<16xf32>
    %15 = vector.shape_cast %14 : vector<16xf32> to vector<16x1xf32>
    %cst_3 = arith.constant 3.125000e-02 : f32
    %16 = vector.broadcast %cst_3 : f32 to vector<16x1xf32>
    %17 = arith.mulf %15, %16 : vector<16x1xf32>
    %cst_4 = arith.constant 9.99999974E-6 : f32
    %18 = vector.broadcast %cst_4 : f32 to vector<16x1xf32>
    %19 = arith.addf %17, %18 : vector<16x1xf32>
    %20 = math.rsqrt %19 : vector<16x1xf32>
    %21 = vector.broadcast %20 : vector<16x1xf32> to vector<16x128xf32>
    %22 = arith.mulf %12, %21 : vector<16x128xf32>
    %c0_5 = arith.constant 0 : index
    %c0_6 = arith.constant 0 : index
    %23 = vector.load %arg2[%c0_5, %c0_6] : memref<1x128xf32, #tpu.memory_space<vmem>>, vector<1x128xf32>
    %24 = vector.broadcast %23 : vector<1x128xf32> to vector<16x128xf32>
    %25 = arith.mulf %22, %24 : vector<16x128xf32>
    %c0_7 = arith.constant 0 : index
    %c0_8 = arith.constant 0 : index
    %26 = vector.load %arg3[%c0_7, %c0_8] : memref<1x128xf32, #tpu.memory_space<vmem>>, vector<1x128xf32>
    %27 = vector.broadcast %26 : vector<1x128xf32> to vector<16x128xf32>
    %28 = arith.addf %25, %27 : vector<16x128xf32>
    %c0_9 = arith.constant 0 : index
    %c0_10 = arith.constant 0 : index
    %29 = vector.load %arg4[%c0_9, %c0_10] : memref<128x128xf32, #tpu.memory_space<vmem>>, vector<128x128xf32>
    %cst_11 = arith.constant dense<0.000000e+00> : vector<16x128xf32>
    %30 = tpu.matmul %28, %29, %cst_11 {dimension_numbers = #tpu.dot_dimension_numbers<[1], [0], [0], [1], [0, 0, 1, 1], [], []>} : vector<16x128xf32>, vector<128x128xf32>, vector<16x128xf32> -> vector<16x128xf32>
    %c0_12 = arith.constant 0 : index
    %c0_13 = arith.constant 0 : index
    %31 = vector.load %arg5[%c0_12, %c0_13] : memref<1x128xf32, #tpu.memory_space<vmem>>, vector<1x128xf32>
    %32 = vector.broadcast %31 : vector<1x128xf32> to vector<16x128xf32>
    %33 = arith.addf %30, %32 : vector<16x128xf32>
    %cst_14 = arith.constant 5.000000e-01 : f32
    %34 = vector.broadcast %cst_14 : f32 to vector<16x128xf32>
    %35 = arith.mulf %34, %33 : vector<16x128xf32>
    %cst_15 = arith.constant 0.707106769 : f32
    %36 = vector.broadcast %cst_15 : f32 to vector<16x128xf32>
    %37 = arith.mulf %33, %36 : vector<16x128xf32>
    %38 = math.erf %37 : vector<16x128xf32>
    %cst_16 = arith.constant 1.000000e+00 : f32
    %39 = vector.broadcast %cst_16 : f32 to vector<16x128xf32>
    %40 = arith.addf %39, %38 : vector<16x128xf32>
    %41 = arith.mulf %35, %40 : vector<16x128xf32>
    %c0_17 = arith.constant 0 : index
    %c0_18 = arith.constant 0 : index
    %42 = vector.load %arg6[%c0_17, %c0_18] : memref<128x128xf32, #tpu.memory_space<vmem>>, vector<128x128xf32>
    %cst_19 = arith.constant dense<0.000000e+00> : vector<16x128xf32>
    %43 = tpu.matmul %41, %42, %cst_19 {dimension_numbers = #tpu.dot_dimension_numbers<[1], [0], [0], [1], [0, 0, 1, 1], [], []>} : vector<16x128xf32>, vector<128x128xf32>, vector<16x128xf32> -> vector<16x128xf32>
    %c0_20 = arith.constant 0 : index
    %c0_21 = arith.constant 0 : index
    %44 = vector.load %arg7[%c0_20, %c0_21] : memref<1x128xf32, #tpu.memory_space<vmem>>, vector<1x128xf32>
    %45 = vector.broadcast %44 : vector<1x128xf32> to vector<16x128xf32>
    %46 = arith.addf %43, %45 : vector<16x128xf32>
    %c0_22 = arith.constant 0 : index
    %c0_23 = arith.constant 0 : index
    %47 = vector.load %arg8[%c0_22, %c0_23] : memref<16x128xf32, #tpu.memory_space<vmem>>, vector<16x128xf32>
    tpu.vector_store %arg8[%c0_22, %c0_23], %46 {strides = array<i32>} : memref<16x128xf32, #tpu.memory_space<vmem>>, vector<16x128xf32>,
    return
  }
  func.func @transform_0(%arg0: i32) -> (i32, i32) {
    %c0_i32 = arith.constant 0 : i32
    %c0_i32_0 = arith.constant 0 : i32
    return %arg0, %c0_i32 : i32, i32
  }
  func.func @transform_1(%arg0: i32) -> (i32, i32) {
    %c0_i32 = arith.constant 0 : i32
    %c0_i32_0 = arith.constant 0 : i32
    %c0_i32_1 = arith.constant 0 : i32
    return %c0_i32, %c0_i32_0 : i32, i32
  }
  func.func @transform_2(%arg0: i32) -> (i32, i32) {
    %c0_i32 = arith.constant 0 : i32
    %c0_i32_0 = arith.constant 0 : i32
    %c0_i32_1 = arith.constant 0 : i32
    return %c0_i32, %c0_i32_0 : i32, i32
  }
  func.func @transform_3(%arg0: i32) -> (i32, i32) {
    %c0_i32 = arith.constant 0 : i32
    %c0_i32_0 = arith.constant 0 : i32
    %c0_i32_1 = arith.constant 0 : i32
    return %c0_i32, %c0_i32_0 : i32, i32
  }
  func.func @transform_4(%arg0: i32) -> (i32, i32) {
    %c0_i32 = arith.constant 0 : i32
    %c0_i32_0 = arith.constant 0 : i32
    %c0_i32_1 = arith.constant 0 : i32
    return %c0_i32, %c0_i32_0 : i32, i32
  }
  func.func @transform_5(%arg0: i32) -> (i32, i32) {
    %c0_i32 = arith.constant 0 : i32
    %c0_i32_0 = arith.constant 0 : i32
    %c0_i32_1 = arith.constant 0 : i32
    return %c0_i32, %c0_i32_0 : i32, i32
  }
  func.func @transform_6(%arg0: i32) -> (i32, i32) {
    %c0_i32 = arith.constant 0 : i32
    %c0_i32_0 = arith.constant 0 : i32
    %c0_i32_1 = arith.constant 0 : i32
    return %c0_i32, %c0_i32_0 : i32, i32
  }
  func.func @transform_7(%arg0: i32) -> (i32, i32) {
    %c0_i32 = arith.constant 0 : i32
    %c0_i32_0 = arith.constant 0 : i32
    return %arg0, %c0_i32 : i32, i32
  }
}

</mosaic_0001>

<llo_original>
// kernel: prenorm_feed_forward.1
$region0: #{prenorm_feed_forward.1}
  #allocation0 [shape = 'u32[]', space=smem, size = 0x4, offset = 0x4, fixed_abs, tag = 'smem constant byte address 0x4 - core index']
  #allocation1 [shape = 'u32[144,128]{1,0:T(1,128)}', space=vmem, size = 0x12000, scoped, tag = 'internal scratch']
  %s0 = inlined_call_operand.vmem [shape: f32[16,128], index: 0, kind: input, shape index: {}]
  %s1 = inlined_call_operand.vmem [shape: f32[1,128], index: 1, kind: input, shape index: {}]
  %s2 = inlined_call_operand.vmem [shape: f32[1,128], index: 2, kind: input, shape index: {}]
  %s3 = inlined_call_operand.vmem [shape: f32[128,128], index: 3, kind: input, shape index: {}]
  %s4 = inlined_call_operand.vmem [shape: f32[1,128], index: 4, kind: input, shape index: {}]
  %s5 = inlined_call_operand.vmem [shape: f32[128,128], index: 5, kind: input, shape index: {}]
  %s6 = inlined_call_operand.vmem [shape: f32[1,128], index: 6, kind: input, shape index: {}]
  %s7 = inlined_call_operand.vmem [shape: f32[16,128], index: 7, kind: output, shape index: {}]
  %s8 = sld [smem:[#allocation0]]
  $region38: #{prenorm_feed_forward.1} parent=0
    _
  %s10 = ssub.s32 1, %s8
  %s11 = scalar_select 0, %s10, %s8
  // Predicated region
  $region2: #{prenorm_feed_forward.1} parent=0 // pred_check
    _
  $region3: #{prenorm_feed_forward.1} parent=0 // pred_check_branch
    %13 = sbr.rel (0) target = $region5
  $region4: #{prenorm_feed_forward.1} parent=0 // pred_region
    _
  $region5: #{prenorm_feed_forward.1} parent=0 // pred_fallthru
    _
  // Predicated region
  $region6: #{prenorm_feed_forward.1} parent=0 // pred_check
    _
  $region7: #{prenorm_feed_forward.1} parent=0 // pred_check_branch
    %15 = sbr.rel (0) target = $region9
  $region8: #{prenorm_feed_forward.1} parent=0 // pred_region
    _
  $region9: #{prenorm_feed_forward.1} parent=0 // pred_fallthru
    _
  // Predicated region
  $region10: #{prenorm_feed_forward.1} parent=0 // pred_check
    _
  $region11: #{prenorm_feed_forward.1} parent=0 // pred_check_branch
    %17 = sbr.rel (0) target = $region13
  $region12: #{prenorm_feed_forward.1} parent=0 // pred_region
    _
  $region13: #{prenorm_feed_forward.1} parent=0 // pred_fallthru
    _
  // Predicated region
  $region14: #{prenorm_feed_forward.1} parent=0 // pred_check
    _
  $region15: #{prenorm_feed_forward.1} parent=0 // pred_check_branch
    %19 = sbr.rel (0) target = $region17
  $region16: #{prenorm_feed_forward.1} parent=0 // pred_region
    _
  $region17: #{prenorm_feed_forward.1} parent=0 // pred_fallthru
    _
  // Predicated region
  $region18: #{prenorm_feed_forward.1} parent=0 // pred_check
    _
  $region19: #{prenorm_feed_forward.1} parent=0 // pred_check_branch
    %21 = sbr.rel (0) target = $region21
  $region20: #{prenorm_feed_forward.1} parent=0 // pred_region
    _
  $region21: #{prenorm_feed_forward.1} parent=0 // pred_fallthru
    _
  // Predicated region
  $region22: #{prenorm_feed_forward.1} parent=0 // pred_check
    _
  $region23: #{prenorm_feed_forward.1} parent=0 // pred_check_branch
    %23 = sbr.rel (0) target = $region25
  $region24: #{prenorm_feed_forward.1} parent=0 // pred_region
    _
  $region25: #{prenorm_feed_forward.1} parent=0 // pred_fallthru
    _
  // Predicated region
  $region26: #{prenorm_feed_forward.1} parent=0 // pred_check
    _
  $region27: #{prenorm_feed_forward.1} parent=0 // pred_check_branch
    %25 = sbr.rel (0) target = $region29
  $region28: #{prenorm_feed_forward.1} parent=0 // pred_region
    _
  $region29: #{prenorm_feed_forward.1} parent=0 // pred_fallthru
    _
  %v26 = vld [vmem:[%s0] sm:$0xff]
  %v27 = vld [vmem:[%s0 + $0x8] sm:$0xff]
  %v28 = vlaneseq
  %v29 = vand.u32 %v28, 127
  %vm30 = vcmp.lt.s32.totalorder %v29, 32
  %v31 = vsel %vm30, 1, 0
  %v32 = vcvt.s32.f32 %v31
  %33 = vadd.xlane.f32.xlu0 %v26
  %v34 = vpop.xlane.xlu0 %33
  %35 = vadd.xlane.f32.xlu0 %v27
  %v36 = vpop.xlane.xlu0 %35
  %v37 = vmul.f32 %v34, 0.03125
  %v38 = vmul.f32 %v36, 0.03125
  %v39 = vsub.f32 %v26, %v37
  %v40 = vsub.f32 %v27, %v38
  %v41 = vmul.f32 %v39, %v32
  %v42 = vmul.f32 %v40, %v32
  %v43 = vmul.f32 %v41, %v41
  %v44 = vmul.f32 %v42, %v42
  %45 = vadd.xlane.f32.xlu0 %v43
  %v46 = vpop.xlane.xlu0 %45
  %47 = vadd.xlane.f32.xlu0 %v44
  %v48 = vpop.xlane.xlu0 %47
  %v49 = vmul.f32 %v46, 0.03125
  %v50 = vmul.f32 %v48, 0.03125
  %v51 = vadd.f32 %v49, 1e-05
  %v52 = vadd.f32 %v50, 1e-05
  %v53 = vrsqrt.pop %v51
  %v54 = vrsqrt.pop %v52
  %v55 = vmul.f32 %v41, %v53
  %v56 = vmul.f32 %v42, %v54
  %v57 = vld [vmem:[%s1] sm:$0x1]
  %v59 = vlaneseq
  %v60 = vshrl.u32 %v59, 7
  %v61 = vsub.s32 0, %v60
  %v62 = vrot.slane %v57, %v61
  %v64 = vmul.f32 %v55, %v62
  %v65 = vmul.f32 %v56, %v62
  %v66 = vld [vmem:[%s2] sm:$0x1]
  %v68 = vlaneseq
  %v69 = vshrl.u32 %v68, 7
  %v70 = vsub.s32 0, %v69
  %v71 = vrot.slane %v66, %v70
  %v73 = vadd.f32 %v64, %v71
  %v74 = vadd.f32 %v65, %v71
  %v75 = vld [vmem:[%s3] sm:$0xff]
  %v76 = vld [vmem:[%s3 + $0x8] sm:$0xff]
  %v77 = vld [vmem:[%s3 + $0x10] sm:$0xff]
  %v78 = vld [vmem:[%s3 + $0x18] sm:$0xff]
  %v79 = vld [vmem:[%s3 + $0x20] sm:$0xff]
  %v80 = vld [vmem:[%s3 + $0x28] sm:$0xff]
  %v81 = vld [vmem:[%s3 + $0x30] sm:$0xff]
  %v82 = vld [vmem:[%s3 + $0x38] sm:$0xff]
  %v83 = vld [vmem:[%s3 + $0x40] sm:$0xff]
  %v84 = vld [vmem:[%s3 + $0x48] sm:$0xff]
  %v85 = vld [vmem:[%s3 + $0x50] sm:$0xff]
  %v86 = vld [vmem:[%s3 + $0x58] sm:$0xff]
  %v87 = vld [vmem:[%s3 + $0x60] sm:$0xff]
  %v88 = vld [vmem:[%s3 + $0x68] sm:$0xff]
  %v89 = vld [vmem:[%s3 + $0x70] sm:$0xff]
  %v90 = vld [vmem:[%s3 + $0x78] sm:$0xff]
  %v91 = vld [vmem:[%s4] sm:$0x1]
  %v93 = vlaneseq
  %v94 = vshrl.u32 %v93, 7
  %v95 = vsub.s32 0, %v94
  %v96 = vrot.slane %v91, %v95
  %98 = vmatprep.subr.mxu0 0.0
  %99 = vmatpush1.msra.mxu0 %v75
  %100 = vmatprep.subr.mxu0 0.0
  %101 = vmatpush1.msra.mxu0 %v76
  %102 = vmatprep.subr.mxu0 0.0
  %103 = vmatpush1.msra.mxu0 %v77
  %104 = vmatprep.subr.mxu0 0.0
  %105 = vmatpush1.msra.mxu0 %v78
  %106 = vmatprep.subr.mxu0 0.0
  %107 = vmatpush1.msra.mxu0 %v79
  %108 = vmatprep.subr.mxu0 0.0
  %109 = vmatpush1.msra.mxu0 %v80
  %110 = vmatprep.subr.mxu0 0.0
  %111 = vmatpush1.msra.mxu0 %v81
  %112 = vmatprep.subr.mxu0 0.0
  %113 = vmatpush1.msra.mxu0 %v82
  %114 = vmatprep.subr.mxu0 0.0
  %115 = vmatpush1.msra.mxu0 %v83
  %116 = vmatprep.subr.mxu0 0.0
  %117 = vmatpush1.msra.mxu0 %v84
  %118 = vmatprep.subr.mxu0 0.0
  %119 = vmatpush1.msra.mxu0 %v85
  %120 = vmatprep.subr.mxu0 0.0
  %121 = vmatpush1.msra.mxu0 %v86
  %122 = vmatprep.subr.mxu0 0.0
  %123 = vmatpush1.msra.mxu0 %v87
  %124 = vmatprep.subr.mxu0 0.0
  %125 = vmatpush1.msra.mxu0 %v88
  %126 = vmatprep.subr.mxu0 0.0
  %127 = vmatpush1.msra.mxu0 %v89
  %128 = vmatprep.subr.mxu0 0.0
  %129 = vmatpush1.msra.mxu0 %v90
  %130 = vmatprep.subr.mxu0 0.0
  %131 = vmatpush1.msra.mxu0 0.0
  %132 = vmatprep.subr.mxu0 0.0
  %133 = vmatpush1.msra.mxu0 0.0
  %134 = vmatprep.subr.mxu0 0.0
  %135 = vmatpush1.msra.mxu0 0.0
  %136 = vmatprep.subr.mxu0 0.0
  %137 = vmatpush1.msra.mxu0 0.0
  %138 = vmatprep.subr.mxu0 0.0
  %139 = vmatpush1.msra.mxu0 0.0
  %140 = vmatprep.subr.mxu0 0.0
  %141 = vmatpush1.msra.mxu0 0.0
  %142 = vmatprep.subr.mxu0 0.0
  %143 = vmatpush1.msra.mxu0 0.0
  %144 = vmatprep.subr.mxu0 0.0
  %145 = vmatpush1.msra.mxu0 0.0
  %146 = vmatprep.subr.mxu0 0.0
  %147 = vmatpush1.msra.mxu0 0.0
  %148 = vmatprep.subr.mxu0 0.0
  %149 = vmatpush1.msra.mxu0 0.0
  %150 = vmatprep.subr.mxu0 0.0
  %151 = vmatpush1.msra.mxu0 0.0
  %152 = vmatprep.subr.mxu0 0.0
  %153 = vmatpush1.msra.mxu0 0.0
  %154 = vmatprep.subr.mxu0 0.0
  %155 = vmatpush1.msra.mxu0 0.0
  %156 = vmatprep.subr.mxu0 0.0
  %157 = vmatpush1.msra.mxu0 0.0
  %158 = vmatprep.subr.mxu0 0.0
  %159 = vmatpush1.msra.mxu0 0.0
  %160 = vmatprep.subr.mxu0 0.0
  %161 = vmatpush1.msra.mxu0 0.0
  %162 = vmatprep.mubr.f32.mxu0 0.0
  %163 = vmatmul.mubr.f32.gmra.mrb[0].mxu0 %v73
  %v164 = vpop.f32.mrb[0].mxu0
  %v165 = vadd.f32 %v96, %v164
  %v166 = vpop.f32.mrb[0].mxu0
  %167 = vmatprep.mubr.f32.mxu0 0.0
  %168 = vmatmul.mubr.f32.gmra.mrb[0].mxu0 %v74
  %v169 = vpop.f32.mrb[0].mxu0
  %v170 = vadd.f32 %v96, %v169
  %v171 = vpop.f32.mrb[0].mxu0
  %172 = vdwg.mxu0
  %v173 = vmul.f32 %v165, 0.5
  %v174 = vmul.f32 %v170, 0.5
  %v175 = vmul.f32 %v165, 0.70710677
  %v176 = vmul.f32 %v170, 0.70710677
  %v177 = verf.f32.pop %v175
  %v178 = verf.f32.pop %v176
  %v179 = vadd.f32 %v177, 1.0
  %v180 = vadd.f32 %v178, 1.0
  %v181 = vmul.f32 %v173, %v179
  %v182 = vmul.f32 %v174, %v180
  %v183 = vld [vmem:[%s5] sm:$0xff]
  %v184 = vld [vmem:[%s5 + $0x8] sm:$0xff]
  %v185 = vld [vmem:[%s5 + $0x10] sm:$0xff]
  %v186 = vld [vmem:[%s5 + $0x18] sm:$0xff]
  %v187 = vld [vmem:[%s5 + $0x20] sm:$0xff]
  %v188 = vld [vmem:[%s5 + $0x28] sm:$0xff]
  %v189 = vld [vmem:[%s5 + $0x30] sm:$0xff]
  %v190 = vld [vmem:[%s5 + $0x38] sm:$0xff]
  %v191 = vld [vmem:[%s5 + $0x40] sm:$0xff]
  %v192 = vld [vmem:[%s5 + $0x48] sm:$0xff]
  %v193 = vld [vmem:[%s5 + $0x50] sm:$0xff]
  %v194 = vld [vmem:[%s5 + $0x58] sm:$0xff]
  %v195 = vld [vmem:[%s5 + $0x60] sm:$0xff]
  %v196 = vld [vmem:[%s5 + $0x68] sm:$0xff]
  %v197 = vld [vmem:[%s5 + $0x70] sm:$0xff]
  %v198 = vld [vmem:[%s5 + $0x78] sm:$0xff]
  %v199 = vld [vmem:[%s6] sm:$0x1]
  %v201 = vlaneseq
  %v202 = vshrl.u32 %v201, 7
  %v203 = vsub.s32 0, %v202
  %v204 = vrot.slane %v199, %v203
  %206 = vmatprep.subr.mxu0 0.0
  %207 = vmatpush1.msra.mxu0 %v183
  %208 = vmatprep.subr.mxu0 0.0
  %209 = vmatpush1.msra.mxu0 %v184
  %210 = vmatprep.subr.mxu0 0.0
  %211 = vmatpush1.msra.mxu0 %v185
  %212 = vmatprep.subr.mxu0 0.0
  %213 = vmatpush1.msra.mxu0 %v186
  %214 = vmatprep.subr.mxu0 0.0
  %215 = vmatpush1.msra.mxu0 %v187
  %216 = vmatprep.subr.mxu0 0.0
  %217 = vmatpush1.msra.mxu0 %v188
  %218 = vmatprep.subr.mxu0 0.0
  %219 = vmatpush1.msra.mxu0 %v189
  %220 = vmatprep.subr.mxu0 0.0
  %221 = vmatpush1.msra.mxu0 %v190
  %222 = vmatprep.subr.mxu0 0.0
  %223 = vmatpush1.msra.mxu0 %v191
  %224 = vmatprep.subr.mxu0 0.0
  %225 = vmatpush1.msra.mxu0 %v192
  %226 = vmatprep.subr.mxu0 0.0
  %227 = vmatpush1.msra.mxu0 %v193
  %228 = vmatprep.subr.mxu0 0.0
  %229 = vmatpush1.msra.mxu0 %v194
  %230 = vmatprep.subr.mxu0 0.0
  %231 = vmatpush1.msra.mxu0 %v195
  %232 = vmatprep.subr.mxu0 0.0
  %233 = vmatpush1.msra.mxu0 %v196
  %234 = vmatprep.subr.mxu0 0.0
  %235 = vmatpush1.msra.mxu0 %v197
  %236 = vmatprep.subr.mxu0 0.0
  %237 = vmatpush1.msra.mxu0 %v198
  %238 = vmatprep.subr.mxu0 0.0
  %239 = vmatpush1.msra.mxu0 0.0
  %240 = vmatprep.subr.mxu0 0.0
  %241 = vmatpush1.msra.mxu0 0.0
  %242 = vmatprep.subr.mxu0 0.0
  %243 = vmatpush1.msra.mxu0 0.0
  %244 = vmatprep.subr.mxu0 0.0
  %245 = vmatpush1.msra.mxu0 0.0
  %246 = vmatprep.subr.mxu0 0.0
  %247 = vmatpush1.msra.mxu0 0.0
  %248 = vmatprep.subr.mxu0 0.0
  %249 = vmatpush1.msra.mxu0 0.0
  %250 = vmatprep.subr.mxu0 0.0
  %251 = vmatpush1.msra.mxu0 0.0
  %252 = vmatprep.subr.mxu0 0.0
  %253 = vmatpush1.msra.mxu0 0.0
  %254 = vmatprep.subr.mxu0 0.0
  %255 = vmatpush1.msra.mxu0 0.0
  %256 = vmatprep.subr.mxu0 0.0
  %257 = vmatpush1.msra.mxu0 0.0
  %258 = vmatprep.subr.mxu0 0.0
  %259 = vmatpush1.msra.mxu0 0.0
  %260 = vmatprep.subr.mxu0 0.0
  %261 = vmatpush1.msra.mxu0 0.0
  %262 = vmatprep.subr.mxu0 0.0
  %263 = vmatpush1.msra.mxu0 0.0
  %264 = vmatprep.subr.mxu0 0.0
  %265 = vmatpush1.msra.mxu0 0.0
  %266 = vmatprep.subr.mxu0 0.0
  %267 = vmatpush1.msra.mxu0 0.0
  %268 = vmatprep.subr.mxu0 0.0
  %269 = vmatpush1.msra.mxu0 0.0
  %270 = vmatprep.mubr.f32.mxu0 0.0
  %271 = vmatmul.mubr.f32.gmra.mrb[0].mxu0 %v181
  %v272 = vpop.f32.mrb[0].mxu0
  %v273 = vadd.f32 %v204, %v272
  %v274 = vpop.f32.mrb[0].mxu0
  %275 = vmatprep.mubr.f32.mxu0 0.0
  %276 = vmatmul.mubr.f32.gmra.mrb[0].mxu0 %v182
  %v277 = vpop.f32.mrb[0].mxu0
  %v278 = vadd.f32 %v204, %v277
  %v279 = vpop.f32.mrb[0].mxu0
  %280 = vdwg.mxu0
  %281 = vst [vmem:[%s7] sm:$0xff] %v273
  %282 = vst [vmem:[%s7 + $0x8] sm:$0xff] %v278
  // Predicated region
  $region30: #{prenorm_feed_forward.1} parent=0 // pred_check
    _
  $region31: #{prenorm_feed_forward.1} parent=0 // pred_check_branch
    %284 = sbr.rel (0) target = $region33
  $region32: #{prenorm_feed_forward.1} parent=0 // pred_region
    _
  $region33: #{prenorm_feed_forward.1} parent=0 // pred_fallthru
    _
  // Predicated region
  $region34: #{prenorm_feed_forward.1} parent=0 // pred_check
    _
  $region35: #{prenorm_feed_forward.1} parent=0 // pred_check_branch
    %286 = sbr.rel (0) target = $region37
  $region36: #{prenorm_feed_forward.1} parent=0 // pred_region
    _
  $region37: #{prenorm_feed_forward.1} parent=0 // pred_fallthru
    _

</llo_original>
